<compile_context>
chip_gen: v6e
topology: v6e:2x2x1
jax: 0.10.0
libtpu: 0.0.40
codegen_flags: <defaults>
</compile_context>

<pallas_src>
import math
from functools import partial

import jax
import jax.numpy as jnp
from jax.experimental import pallas as pl
from jax.experimental.pallas import tpu as pltpu

_LANE = 128
_SUBLANE = 8

_VMEM_LIMIT_BYTES = 32 * 1024 * 1024      # scoped-VMEM limit handed to Mosaic
_VMEM_BUDGET_BYTES = 24 * 1024 * 1024     # what the tile picker may plan for
_RESIDENT_W_MAX_BYTES = 8 * 1024 * 1024   # max double-buffered resident weight
_KSPLIT_W_TILE_BYTES = 4 * 1024 * 1024    # target dbl-buffered W tile (K-split)


def _round_up(x, m):
    return ((x + m - 1) // m) * m


def _pick_tile_m(batch, per_row_bytes, fixed_bytes, max_tm=1024,
                 budget_bytes=_VMEM_BUDGET_BYTES):
    """Largest sublane-aligned batch tile whose working set fits the budget.

    `per_row_bytes` / `fixed_bytes` must already include the default 2x
    double-buffering Pallas applies to every BlockSpec operand.
    """
    batch8 = _round_up(batch, _SUBLANE)
    # Keep >= 2 grid steps along the parallel batch axis when there is enough
    # work, so both v7x TensorCores get a share (harmless on v5e/v6e).
    if batch8 >= 4 * _SUBLANE:
        max_tm = min(max_tm, _round_up(pl.cdiv(batch8, 2), _SUBLANE))
    tm = min(_round_up(max_tm, _SUBLANE), batch8)
    while tm > _SUBLANE and fixed_bytes + tm * per_row_bytes > budget_bytes:
        tm = _round_up(tm // 2, _SUBLANE)
    return max(tm, _SUBLANE)


def _logreg_kernel(x_ref, wt_ref, b_ref, o_ref):
    # x_ref: (TM, D) | wt_ref: (D, C_pad) grid-resident | b_ref: (1, C_pad)
    # o_ref: (TM, C_pad) lane-dense store.
    y = jnp.dot(x_ref[...], wt_ref[...], preferred_element_type=jnp.float32)
    o_ref[...] = (y + b_ref[...]).astype(o_ref.dtype)


def _logreg_kernel_ksplit(x_ref, wt_ref, b_ref, o_ref, acc_ref):
    # Grid = (batch tiles, K tiles); K axis is the reduction ("arbitrary", last).
    k = pl.program_id(1)

    @pl.when(k == 0)
    def _init():
        acc_ref[...] = jnp.zeros_like(acc_ref)

    acc_ref[...] += jnp.dot(x_ref[...], wt_ref[...],
                            preferred_element_type=jnp.float32)

    @pl.when(k == pl.num_programs(1) - 1)
    def _finalize():
        o_ref[...] = (acc_ref[...] + b_ref[...]).astype(o_ref.dtype)


@partial(jax.jit, static_argnames=("n_class", "k_block"))
def _logreg_forward(x, wt, b2d, *, n_class, k_block):
    """Pallas y = x @ wt + b, sliced back to n_class columns (inside the jit).

    x  : (batch, input_size) f32
    wt : (input_size, c_pad) f32  if k_block is None  (class dim zero-padded)
         (d_pad,      c_pad) f32  otherwise           (K and class zero-padded)
    b2d: (1, c_pad) f32
    """
    batch, input_size = x.shape
    kw, c_pad = wt.shape
    itemsize = 4  # float32

    if k_block is None:
        # Resident-weight path: whole (double-buffered) weight + bias live in
        # VMEM across the batch grid; x / out are streamed in batch tiles.
        fixed = 2 * (kw * c_pad + c_pad) * itemsize
        per_row = 2 * (input_size + c_pad) * itemsize
        tm = _pick_tile_m(batch, per_row, fixed)
        grid = (pl.cdiv(batch, tm),)

        cost = pl.CostEstimate(
            flops=2 * batch * input_size * c_pad,
            transcendentals=0,
            bytes_accessed=itemsize * (batch * input_size + kw * c_pad
                                       + batch * c_pad + c_pad),
        )
        out = pl.pallas_call(
            _logreg_kernel,
            out_shape=jax.ShapeDtypeStruct((batch, c_pad), jnp.float32),
            grid=grid,
            in_specs=[
                pl.BlockSpec((tm, input_size), lambda i: (i, 0)),
                pl.BlockSpec((kw, c_pad), lambda i: (0, 0)),   # grid-invariant
                pl.BlockSpec((1, c_pad), lambda i: (0, 0)),    # grid-invariant
            ],
            out_specs=pl.BlockSpec((tm, c_pad), lambda i: (i, 0)),
            compiler_params=pltpu.CompilerParams(
                dimension_semantics=("parallel",),
                vmem_limit_bytes=_VMEM_LIMIT_BYTES,
            ),
            cost_estimate=cost,
        )(x, wt, b2d)
    else:
        # K-split path (large input_size): stream weight K-tiles and keep a
        # full-width f32 accumulator; bias add + store on the last K step.
        d_pad = kw                                   # multiple of k_block
        if input_size != d_pad:
            # Zero-pad only the K dim of x so the zero-padded weight rows never
            # meet uninitialized VMEM. Negligible traffic vs. the matmul reads
            # at the input sizes that take this path.
            x = jnp.pad(x, ((0, 0), (0, d_pad - input_size)))
        k_steps = d_pad // k_block

        fixed = 2 * (k_block * c_pad + c_pad) * itemsize
        per_row = (2 * (k_block + c_pad) + c_pad) * itemsize  # x/out dbl + acc
        tm = _pick_tile_m(batch, per_row, fixed)
        grid = (pl.cdiv(batch, tm), k_steps)

        cost = pl.CostEstimate(
            flops=2 * batch * d_pad * c_pad,
            transcendentals=0,
            bytes_accessed=itemsize * (batch * d_pad + d_pad * c_pad
                                       + batch * c_pad + c_pad),
        )
        out = pl.pallas_call(
            _logreg_kernel_ksplit,
            out_shape=jax.ShapeDtypeStruct((batch, c_pad), jnp.float32),
            grid=grid,
            in_specs=[
                pl.BlockSpec((tm, k_block), lambda i, k: (i, k)),
                pl.BlockSpec((k_block, c_pad), lambda i, k: (k, 0)),
                pl.BlockSpec((1, c_pad), lambda i, k: (0, 0)),
            ],
            out_specs=pl.BlockSpec((tm, c_pad), lambda i, k: (i, 0)),
            scratch_shapes=[pltpu.VMEM((tm, c_pad), jnp.float32)],
            compiler_params=pltpu.CompilerParams(
                dimension_semantics=("parallel", "arbitrary"),
                vmem_limit_bytes=_VMEM_LIMIT_BYTES,
            ),
            cost_estimate=cost,
        )(x, wt, b2d)

    # Slice back to the true class count inside the jit so XLA can fuse it.
    return out[:, :n_class]


class LogRegPallas:
    """Deterministically-initialized Pallas stand-in for wrench's LogReg."""

    def __init__(self, n_class, input_size, binary_mode=False, k_block=None):
        if binary_mode:
            assert n_class == 2
            n_class = 1
        self.n_class = n_class
        self.input_size = input_size

        # Mimic nn.Linear default init: U(-1/sqrt(fan_in), 1/sqrt(fan_in)).
        key = jax.random.PRNGKey(0)
        k_w, k_b = jax.random.split(key)
        bound = 1.0 / math.sqrt(input_size)
        self.weight = jax.random.uniform(
            k_w, (n_class, input_size), jnp.float32, -bound, bound)
        self.bias = jax.random.uniform(
            k_b, (n_class,), jnp.float32, -bound, bound)

        c_pad = _round_up(n_class, _LANE)   # 128-lane output -> unmasked vst

        # Pick the K strategy once (hoisted): keep the whole weight resident in
        # VMEM when its double-buffered footprint is small, otherwise use the
        # K-split grid.  `k_block` can be forced (e.g. for testing).
        if k_block is None and 2 * input_size * c_pad * 4 > _RESIDENT_W_MAX_BYTES:
            k_block = max(_LANE,
                          (_KSPLIT_W_TILE_BYTES // (2 * c_pad * 4))
                          // _LANE * _LANE)
        self.k_block = k_block

        # Hoist transpose + padding out of the per-call path.
        wt = self.weight.T                            # (D, C)
        if k_block is None:
            self.wt = jnp.pad(wt, ((0, 0), (0, c_pad - n_class)))
        else:
            d_pad = _round_up(input_size, k_block)
            self.wt = jnp.pad(wt, ((0, d_pad - input_size),
                                   (0, c_pad - n_class)))
        self.b2d = jnp.pad(self.bias, (0, c_pad - n_class)).reshape(1, c_pad)

    def forward(self, batch, return_features=False):
        x = jnp.asarray(batch["features"], jnp.float32)
        return _logreg_forward(x, self.wt, self.b2d,
                               n_class=self.n_class, k_block=self.k_block)


if __name__ == "__main__":
    # 1) Resident-weight path, tiny shapes.
    batch_size, input_size, n_class = 8, 32, 4
    x = jax.random.normal(jax.random.PRNGKey(0),
                          (batch_size, input_size), jnp.float32)
    model = LogRegPallas(n_class=n_class, input_size=input_size)
    out = jax.block_until_ready(model.forward({"features": x}))
    ref = x @ model.weight.T + model.bias
    assert out.shape == (batch_size, n_class)
    assert jnp.allclose(out, ref, atol=1e-5, rtol=1e-5)

    # 2) Batch that is not a multiple of the tile / sublane size: exercises the
    #    cdiv grid with a masked partial trailing block and >= 2 grid steps.
    x2 = jax.random.normal(jax.random.PRNGKey(1), (37, input_size), jnp.float32)
    out2 = jax.block_until_ready(model.forward({"features": x2}))
    ref2 = x2 @ model.weight.T + model.bias
    assert out2.shape == (37, n_class)
    assert jnp.allclose(out2, ref2, atol=1e-5, rtol=1e-5)

    # 3) K-split path (accumulator + pl.when), forced with a small k_block so
    #    it stays cheap to test: input_size=256 -> two K steps.
    model_k = LogRegPallas(n_class=n_class, input_size=256, k_block=128)
    x3 = jax.random.normal(jax.random.PRNGKey(2), (37, 256), jnp.float32)
    out3 = jax.block_until_ready(model_k.forward({"features": x3}))
    ref3 = x3 @ model_k.weight.T + model_k.bias
    assert out3.shape == (37, n_class)
    assert jnp.allclose(out3, ref3, atol=1e-4, rtol=1e-4)

    print("KERNEL_OK")
</pallas_src>

<mosaic_0001>
module attributes {stable_mosaic.version = 11 : i64} {
  func.func @_logreg_kernel(%arg0: i32, %arg1: memref<8x32xf32, #tpu.memory_space<vmem>>, %arg2: memref<32x128xf32, #tpu.memory_space<vmem>>, %arg3: memref<1x128xf32, #tpu.memory_space<vmem>>, %arg4: memref<8x128xf32, #tpu.memory_space<vmem>>) attributes {dimension_semantics = [#tpu.dimension_semantics<parallel>], iteration_bounds = array<i64: 1>, scalar_prefetch = 0 : i64, scratch_operands = 0 : i64, tpu.core_type = #tpu.core_type<tc>, window_params = [{transform_indices = @transform_0, window_bounds = array<i64: 8, 32>}, {pipeline_mode = #tpu.pipeline_mode<synchronous>, transform_indices = @transform_1, window_bounds = array<i64: 32, 128>}, {pipeline_mode = #tpu.pipeline_mode<synchronous>, transform_indices = @transform_2, window_bounds = array<i64: 1, 128>}, {transform_indices = @transform_3, window_bounds = array<i64: 8, 128>}]} {
    %c0 = arith.constant 0 : index
    %c0_0 = arith.constant 0 : index
    %0 = vector.load %arg1[%c0, %c0_0] : memref<8x32xf32, #tpu.memory_space<vmem>>, vector<8x32xf32>
    %c0_1 = arith.constant 0 : index
    %c0_2 = arith.constant 0 : index
    %1 = vector.load %arg2[%c0_1, %c0_2] : memref<32x128xf32, #tpu.memory_space<vmem>>, vector<32x128xf32>
    %cst = arith.constant dense<0.000000e+00> : vector<8x128xf32>
    %2 = tpu.matmul %0, %1, %cst {dimension_numbers = #tpu.dot_dimension_numbers<[1], [0], [0], [1], [0, 0, 1, 1], [], []>} : vector<8x32xf32>, vector<32x128xf32>, vector<8x128xf32> -> vector<8x128xf32>
    %c0_3 = arith.constant 0 : index
    %c0_4 = arith.constant 0 : index
    %3 = vector.load %arg3[%c0_3, %c0_4] : memref<1x128xf32, #tpu.memory_space<vmem>>, vector<1x128xf32>
    %4 = vector.broadcast %3 : vector<1x128xf32> to vector<8x128xf32>
    %5 = arith.addf %2, %4 : vector<8x128xf32>
    %c0_5 = arith.constant 0 : index
    %c0_6 = arith.constant 0 : index
    %6 = vector.load %arg4[%c0_5, %c0_6] : memref<8x128xf32, #tpu.memory_space<vmem>>, vector<8x128xf32>
    tpu.vector_store %arg4[%c0_5, %c0_6], %5 {strides = array<i32>} : memref<8x128xf32, #tpu.memory_space<vmem>>, vector<8x128xf32>,
    return
  }
  func.func @transform_0(%arg0: i32) -> (i32, i32) {
    %c0_i32 = arith.constant 0 : i32
    %c0_i32_0 = arith.constant 0 : i32
    return %arg0, %c0_i32 : i32, i32
  }
  func.func @transform_1(%arg0: i32) -> (i32, i32) {
    %c0_i32 = arith.constant 0 : i32
    %c0_i32_0 = arith.constant 0 : i32
    %c0_i32_1 = arith.constant 0 : i32
    return %c0_i32, %c0_i32_0 : i32, i32
  }
  func.func @transform_2(%arg0: i32) -> (i32, i32) {
    %c0_i32 = arith.constant 0 : i32
    %c0_i32_0 = arith.constant 0 : i32
    %c0_i32_1 = arith.constant 0 : i32
    return %c0_i32, %c0_i32_0 : i32, i32
  }
  func.func @transform_3(%arg0: i32) -> (i32, i32) {
    %c0_i32 = arith.constant 0 : i32
    %c0_i32_0 = arith.constant 0 : i32
    return %arg0, %c0_i32 : i32, i32
  }
}

</mosaic_0001>

<llo_original>
// kernel: _logreg_forward.1
$region0: #{_logreg_forward.1}
  #allocation0 [shape = 'u32[]', space=smem, size = 0x4, offset = 0x4, fixed_abs, tag = 'smem constant byte address 0x4 - core index']
  #allocation1 [shape = 'u32[144,128]{1,0:T(1,128)}', space=vmem, size = 0x12000, scoped, tag = 'internal scratch']
  %s0 = inlined_call_operand.hbm [shape: f32[8,32], index: 0, kind: input, shape index: {}]
  %s1 = inlined_call_operand.hbm [shape: f32[32,128], index: 1, kind: input, shape index: {}]
  %s2 = inlined_call_operand.vmem [shape: f32[1,128], index: 2, kind: input, shape index: {}]
  %s3 = inlined_call_operand.vmem [shape: f32[8,128], index: 3, kind: output, shape index: {}]
  %s4 = sld [smem:[#allocation0]]
  $region30: #{_logreg_forward.1} parent=0
    _
  %s6 = ssub.s32 1, %s4
  %s7 = scalar_select 0, %s6, %s4
  $region1: #{_logreg_forward.1} parent=0
    #allocation2 [shape = 'u8[4096]{0}', space=vmem, size = 0x1000, scoped, tag = 'input window, operand 0, single buffered']
    #allocation3 [shape = 's32[1]{0}', space=sflag, size = 0x4, scoped, tag = 'scoped memory for _logreg_forward.1']
    #allocation4 [shape = 'u8[16384]{0}', space=vmem, size = 0x4000, scoped, tag = 'input window, operand 1, single buffered']
    #allocation5 [shape = 's32[1]{0}', space=sflag, size = 0x4, scoped, tag = 'scoped memory for _logreg_forward.1']
    %8 = vsyncpa [#allocation3], 0
    %9 = vsyncpa [#allocation5], 0
    // Predicated region
    $region2: #{_logreg_forward.1} parent=1 // pred_check
      _
    $region3: #{_logreg_forward.1} parent=1 // pred_check_branch
      %11 = sbr.rel (0) target = $region5
    $region4: #{_logreg_forward.1} parent=1 // pred_region
      %s13 = ssub.s32 128, 128
      %14 = vsyncadd [#allocation3], %s13
      %s16 = sshll.u32 [#allocation2], 4
      %s17 = int_to_ptr.vmem [resolvable:$true] %s16
      %19 = dma.hbm_to_vmem [thread:$0]  %s0, 128, %s17, [#allocation3]
    $region5: #{_logreg_forward.1} parent=1 // pred_fallthru
      _
    // Predicated region
    $region6: #{_logreg_forward.1} parent=1 // pred_check
      _
    $region7: #{_logreg_forward.1} parent=1 // pred_check_branch
      %21 = sbr.rel (0) target = $region9
    $region8: #{_logreg_forward.1} parent=1 // pred_region
      %s23 = ssub.s32 512, 512
      %24 = vsyncadd [#allocation5], %s23
      %s25 = sshll.u32 [#allocation4], 4
      %s26 = int_to_ptr.vmem [resolvable:$true] %s25
      %31 = dma.hbm_to_vmem [thread:$0]  %s1, 512, %s26, [#allocation5], 128, 128, 8
    $region9: #{_logreg_forward.1} parent=1 // pred_fallthru
      _
    // Predicated region
    $region10: #{_logreg_forward.1} parent=1 // pred_check
      _
    $region11: #{_logreg_forward.1} parent=1 // pred_check_branch
      %33 = sbr.rel (0) target = $region13
    $region12: #{_logreg_forward.1} parent=1 // pred_region
      _
    $region13: #{_logreg_forward.1} parent=1 // pred_fallthru
      _
    // Predicated region
    $region14: #{_logreg_forward.1} parent=1 // pred_check
      _
    $region15: #{_logreg_forward.1} parent=1 // pred_check_branch
      %35 = sbr.rel (0) target = $region17
    $region16: #{_logreg_forward.1} parent=1 // pred_region
      %36 = dma.done [#allocation3], 128
    $region17: #{_logreg_forward.1} parent=1 // pred_fallthru
      _
    // Predicated region
    $region18: #{_logreg_forward.1} parent=1 // pred_check
      _
    $region19: #{_logreg_forward.1} parent=1 // pred_check_branch
      %38 = sbr.rel (0) target = $region21
    $region20: #{_logreg_forward.1} parent=1 // pred_region
      %39 = dma.done [#allocation5], 512
    $region21: #{_logreg_forward.1} parent=1 // pred_fallthru
      _
    %v40 = vld [vmem:[#allocation2] sm:$0xff]
    %v41 = vld [vmem:[#allocation4] sm:$0xff]
    %v42 = vld [vmem:[#allocation4 + $0x8] sm:$0xff]
    %v43 = vld [vmem:[#allocation4 + $0x10] sm:$0xff]
    %v44 = vld [vmem:[#allocation4 + $0x18] sm:$0xff]
    %v45 = vld [vmem:[%s2] sm:$0x1]
    %v47 = vlaneseq
    %v48 = vshrl.u32 %v47, 7
    %v49 = vsub.s32 0, %v48
    %v50 = vrot.slane %v45, %v49
    %vm52 = vcmask 261120
    %v54 = vsel %vm52, %v40, 0
    %56 = vmatprep.subr.mxu0 0.0
    %57 = vmatpush1.msra.mxu0 0.0
    %58 = vmatprep.subr.mxu0 0.0
    %59 = vmatpush1.msra.mxu0 0.0
    %60 = vmatprep.subr.mxu0 0.0
    %61 = vmatpush1.msra.mxu0 0.0
    %62 = vmatprep.subr.mxu0 0.0
    %63 = vmatpush1.msra.mxu0 0.0
    %64 = vmatprep.subr.mxu0 0.0
    %65 = vmatpush1.msra.mxu0 0.0
    %66 = vmatprep.subr.mxu0 0.0
    %67 = vmatpush1.msra.mxu0 0.0
    %68 = vmatprep.subr.mxu0 0.0
    %69 = vmatpush1.msra.mxu0 0.0
    %70 = vmatprep.subr.mxu0 0.0
    %71 = vmatpush1.msra.mxu0 0.0
    %72 = vmatprep.subr.mxu0 0.0
    %73 = vmatpush1.msra.mxu0 0.0
    %74 = vmatprep.subr.mxu0 0.0
    %75 = vmatpush1.msra.mxu0 0.0
    %76 = vmatprep.subr.mxu0 0.0
    %77 = vmatpush1.msra.mxu0 0.0
    %78 = vmatprep.subr.mxu0 0.0
    %79 = vmatpush1.msra.mxu0 0.0
    %80 = vmatprep.subr.mxu0 0.0
    %81 = vmatpush1.msra.mxu0 %v44
    %82 = vmatprep.subr.mxu0 0.0
    %83 = vmatpush1.msra.mxu0 %v43
    %84 = vmatprep.subr.mxu0 0.0
    %85 = vmatpush1.msra.mxu0 %v42
    %86 = vmatprep.subr.mxu0 0.0
    %87 = vmatpush1.msra.mxu0 %v41
    %88 = vmatprep.subr.mxu0 0.0
    %89 = vmatpush2.msra.mxu0 0.0
    %90 = vmatprep.subr.mxu0 0.0
    %91 = vmatpush2.msra.mxu0 0.0
    %92 = vmatprep.subr.mxu0 0.0
    %93 = vmatpush2.msra.mxu0 0.0
    %94 = vmatprep.subr.mxu0 0.0
    %95 = vmatpush2.msra.mxu0 0.0
    %96 = vmatprep.subr.mxu0 0.0
    %97 = vmatpush2.msra.mxu0 0.0
    %98 = vmatprep.subr.mxu0 0.0
    %99 = vmatpush2.msra.mxu0 0.0
    %100 = vmatprep.subr.mxu0 0.0
    %101 = vmatpush2.msra.mxu0 0.0
    %102 = vmatprep.subr.mxu0 0.0
    %103 = vmatpush2.msra.mxu0 0.0
    %104 = vmatprep.subr.mxu0 0.0
    %105 = vmatpush2.msra.mxu0 0.0
    %106 = vmatprep.subr.mxu0 0.0
    %107 = vmatpush2.msra.mxu0 0.0
    %108 = vmatprep.subr.mxu0 0.0
    %109 = vmatpush2.msra.mxu0 0.0
    %110 = vmatprep.subr.mxu0 0.0
    %111 = vmatpush2.msra.mxu0 0.0
    %112 = vmatprep.subr.mxu0 0.0
    %113 = vmatpush2.msra.mxu0 0.0
    %114 = vmatprep.subr.mxu0 0.0
    %115 = vmatpush2.msra.mxu0 0.0
    %116 = vmatprep.subr.mxu0 0.0
    %117 = vmatpush2.msra.mxu0 0.0
    %118 = vmatprep.subr.mxu0 0.0
    %119 = vmatpush2.msra.mxu0 0.0
    %120 = vmatprep.mubr.f32.mxu0 0.0
    %121 = vmatmul.mubr.f32.gmra.mxu0 %v54
    %v122 = vpop.f32.mrf.mxu0
    %v123 = vadd.f32 %v50, %v122
    %v124 = vpop.f32.mrf.mxu0
    %125 = vdwg.mxu0
    %126 = vst [vmem:[%s3] sm:$0xff] %v123
    // Predicated region
    $region22: #{_logreg_forward.1} parent=1 // pred_check
      _
    $region23: #{_logreg_forward.1} parent=1 // pred_check_branch
      %128 = sbr.rel (0) target = $region25
    $region24: #{_logreg_forward.1} parent=1 // pred_region
      _
    $region25: #{_logreg_forward.1} parent=1 // pred_fallthru
      _
    // Predicated region
    $region26: #{_logreg_forward.1} parent=1 // pred_check
      _
    $region27: #{_logreg_forward.1} parent=1 // pred_check_branch
      %130 = sbr.rel (0) target = $region29
    $region28: #{_logreg_forward.1} parent=1 // pred_region
      _
    $region29: #{_logreg_forward.1} parent=1 // pred_fallthru
      _
    %131 = vsyncpa [#allocation3], 1
    %132 = vsyncpa [#allocation5], 1

</llo_original>
